<compile_context>
chip_gen: v7x
topology: tpu7x:2x2x1
jax: 0.10.0
libtpu: 0.0.40
codegen_flags: <defaults>
</compile_context>

<pallas_src>
import functools
import math

import jax
import jax.numpy as jnp
from jax import lax
from jax.experimental import pallas as pl
from jax.experimental.pallas import tpu as pltpu

# ----------------------------- configuration -----------------------------
B = 2            # batch
S = 8            # sequence length (power of two -> bitwise block-id trick)
D = 32           # hidden dim
NUM_HEADS = 2
HEAD_DIM = D // NUM_HEADS
BS = B * S


# ------------------------------ Pallas kernel -----------------------------
def _attention_kernel(x_ref, wqkv_ref, bqkv_ref, wo_ref, bo_ref, out_ref):
    """Fused QKV projection + multi-head SDPA + output projection.

    Single invocation (no grid); every operand is fully VMEM resident:
      x_ref    : (B*S, D)   bf16
      wqkv_ref : (D, 3D)    bf16
      bqkv_ref : (1, 3D)    bf16
      wo_ref   : (D, D)     bf16
      bo_ref   : (1, D)     bf16
      out_ref  : (B*S, D)   bf16
    """
    x = x_ref[...]          # bf16 straight into the MXU (f32 accumulate)
    wqkv = wqkv_ref[...]    # bf16
    wo = wo_ref[...]        # bf16

    # qkv = module.qkv(x): one (B*S, D) x (D, 3D) matmul, f32 accumulation,
    # then a single bf16 round (torch bf16-Linear output rounding point).
    qkv = jnp.dot(x, wqkv, preferred_element_type=jnp.float32)
    qkv = (qkv + bqkv_ref[...].astype(jnp.float32)).astype(jnp.bfloat16)

    # Block-diagonal score mask: token rows i and j attend only if they belong
    # to the same batch element (i // S == j // S).  S is a power of two here,
    # so the block id is computed by clearing the low bits (avoids vector
    # integer division).  Hoisted out of the head loop.
    low_bits_clear = jnp.int32(~(S - 1))
    row_blk = lax.broadcasted_iota(jnp.int32, (BS, BS), 0) & low_bits_clear
    col_blk = lax.broadcasted_iota(jnp.int32, (BS, BS), 1) & low_bits_clear
    mask_bias = jnp.where(row_blk == col_blk, 0.0, -1e30).astype(jnp.float32)

    scale = 1.0 / math.sqrt(HEAD_DIM)

    # Output projection is decomposed per head and accumulated in f32:
    #   attn @ Wo + bo == bo + sum_h attn_h @ Wo[h*hd:(h+1)*hd, :]
    out = bo_ref[...].astype(jnp.float32)          # (1, D); broadcasts on add

    for h in range(NUM_HEADS):                     # static unroll, NUM_HEADS=2
        lo = h * HEAD_DIM
        q_h = qkv[:, lo:lo + HEAD_DIM] * scale     # scale folded into q (bf16)
        k_h = qkv[:, D + lo:D + lo + HEAD_DIM]
        v_h = qkv[:, 2 * D + lo:2 * D + lo + HEAD_DIM]

        # scores = q_h @ k_h^T: contract head_dim of k directly (no .T / XLU
        # transpose — folded into the MXU operand).
        s = lax.dot_general(q_h, k_h, (((1,), (1,)), ((), ())),
                            preferred_element_type=jnp.float32)
        s = s + mask_bias
        s = s - jnp.max(s, axis=-1, keepdims=True)
        p = jnp.exp(s)
        p = p * pl.reciprocal(jnp.sum(p, axis=-1, keepdims=True), approx=True)
        p = p.astype(jnp.bfloat16)                 # softmax output in bf16

        o_h = jnp.dot(p, v_h, preferred_element_type=jnp.float32)
        o_h = o_h.astype(jnp.bfloat16)             # SDPA output rounding point

        out = out + jnp.dot(o_h, wo[lo:lo + HEAD_DIM, :],
                            preferred_element_type=jnp.float32)

    out_ref[...] = out.astype(out_ref.dtype)


@jax.jit
def _fused_attention(x_flat_bf16, wqkv, bqkv, wo, bo):
    vmem = functools.partial(pl.BlockSpec, memory_space=pltpu.MemorySpace.VMEM)
    return pl.pallas_call(
        _attention_kernel,
        out_shape=jax.ShapeDtypeStruct((BS, D), jnp.bfloat16),
        in_specs=[vmem(), vmem(), vmem(), vmem(), vmem()],
        out_specs=vmem(),
    )(x_flat_bf16, wqkv, bqkv, wo, bo)


# --------------------- module wrapper (parameter setup) --------------------
_BF16_CAST_DTYPES = tuple(
    t for t in (jnp.float32,
                getattr(jnp, "float8_e4m3fn", None),
                getattr(jnp, "float8_e5m2", None))
    if t is not None)


class FP8CompatibleDiTPallas:
    """JAX analogue of FP8CompatibleDiT wrapping a single SDPA attention block.

    All parameters are held in bfloat16 (as _force_nadit_bfloat16 does for
    FP8/NaDiT models).  forward() casts float32 / fp8 inputs to bfloat16 then
    runs the fused Pallas attention kernel (the patched SDPA attention path).
    """

    def __init__(self, key):
        k1, k2, k3, k4 = jax.random.split(key, 4)
        # torch.nn.Linear default init: U(-1/sqrt(fan_in), 1/sqrt(fan_in)).
        bound = 1.0 / math.sqrt(D)
        # stored as (in_features, out_features) so kernel computes x @ W + b
        self.wqkv = jax.random.uniform(
            k1, (D, 3 * D), jnp.float32, -bound, bound).astype(jnp.bfloat16)
        self.bqkv = jax.random.uniform(
            k2, (1, 3 * D), jnp.float32, -bound, bound).astype(jnp.bfloat16)
        self.wo = jax.random.uniform(
            k3, (D, D), jnp.float32, -bound, bound).astype(jnp.bfloat16)
        self.bo = jax.random.uniform(
            k4, (1, D), jnp.float32, -bound, bound).astype(jnp.bfloat16)
        # TODO(synk): flash-attn availability probing, module monkey-patching
        # and RoPE buffer casting are torch runtime introspection with no
        # Pallas equivalent; parameters are simply created in bf16 here.

    def forward(self, x):
        # FP8CompatibleDiT.forward: float32 / fp8 inputs -> bfloat16.
        if x.dtype in _BF16_CAST_DTYPES:
            x = x.astype(jnp.bfloat16)
        b, s, d = x.shape
        out = _fused_attention(x.reshape(b * s, d),
                               self.wqkv, self.bqkv, self.wo, self.bo)
        return out.reshape(b, s, d)

    __call__ = forward


# ------------------------------- reference --------------------------------
def _reference(x_f32, wqkv, bqkv, wo, bo):
    x = x_f32.astype(jnp.bfloat16).astype(jnp.float32)
    w = wqkv.astype(jnp.float32)
    b = bqkv.astype(jnp.float32)
    qkv = (jnp.einsum("bsd,de->bse", x, w) + b)
    qkv = qkv.astype(jnp.bfloat16).astype(jnp.float32)
    q, k, v = qkv[..., 0:D], qkv[..., D:2 * D], qkv[..., 2 * D:3 * D]

    def split_heads(t):  # (B,S,D) -> (B,H,S,hd)
        return t.reshape(B, S, NUM_HEADS, HEAD_DIM).transpose(0, 2, 1, 3)

    qh, kh, vh = split_heads(q), split_heads(k), split_heads(v)
    scores = jnp.einsum("bhqd,bhkd->bhqk", qh, kh) / math.sqrt(HEAD_DIM)
    p = jax.nn.softmax(scores, axis=-1)
    p = p.astype(jnp.bfloat16).astype(jnp.float32)   # bf16 softmax output
    o = jnp.einsum("bhqk,bhkd->bhqd", p, vh)
    o = o.transpose(0, 2, 1, 3).reshape(B, S, D)
    o = o.astype(jnp.bfloat16).astype(jnp.float32)   # bf16 SDPA output
    out = jnp.einsum("bsd,de->bse", o, wo.astype(jnp.float32)) + bo.astype(jnp.float32)
    return out.astype(jnp.bfloat16)


# ---------------------------------- main -----------------------------------
if __name__ == "__main__":
    key = jax.random.PRNGKey(0)
    k_param, k_x = jax.random.split(key)

    model = FP8CompatibleDiTPallas(k_param)
    x = jax.random.normal(k_x, (B, S, D), dtype=jnp.float32)

    out = jax.block_until_ready(model(x))

    ref = _reference(x, model.wqkv, model.bqkv, model.wo, model.bo)
    err = jnp.max(jnp.abs(out.astype(jnp.float32) - ref.astype(jnp.float32)))
    assert out.shape == (B, S, D) and out.dtype == jnp.bfloat16
    assert float(err) < 5e-2, f"mismatch vs reference: {float(err)}"

    print("KERNEL_OK")
</pallas_src>

<mosaic_0001>
module attributes {stable_mosaic.version = 11 : i64} {
  func.func @_attention_kernel(%arg0: memref<16x32xbf16, #tpu.memory_space<vmem>>, %arg1: memref<32x96xbf16, #tpu.memory_space<vmem>>, %arg2: memref<1x96xbf16, #tpu.memory_space<vmem>>, %arg3: memref<32x32xbf16, #tpu.memory_space<vmem>>, %arg4: memref<1x32xbf16, #tpu.memory_space<vmem>>, %arg5: memref<16x32xbf16, #tpu.memory_space<vmem>>) attributes {dimension_semantics = [], scalar_prefetch = 0 : i64, scratch_operands = 0 : i64, tpu.core_type = #tpu.core_type<tc>} {
    %c0 = arith.constant 0 : index
    %c0_0 = arith.constant 0 : index
    %0 = vector.load %arg0[%c0, %c0_0] : memref<16x32xbf16, #tpu.memory_space<vmem>>, vector<16x32xbf16>
    %c0_1 = arith.constant 0 : index
    %c0_2 = arith.constant 0 : index
    %1 = vector.load %arg1[%c0_1, %c0_2] : memref<32x96xbf16, #tpu.memory_space<vmem>>, vector<32x96xbf16>
    %c0_3 = arith.constant 0 : index
    %c0_4 = arith.constant 0 : index
    %2 = vector.load %arg3[%c0_3, %c0_4] : memref<32x32xbf16, #tpu.memory_space<vmem>>, vector<32x32xbf16>
    %cst = arith.constant dense<0.000000e+00> : vector<16x96xf32>
    %3 = tpu.matmul %0, %1, %cst {dimension_numbers = #tpu.dot_dimension_numbers<[1], [0], [0], [1], [0, 0, 1, 1], [], []>} : vector<16x32xbf16>, vector<32x96xbf16>, vector<16x96xf32> -> vector<16x96xf32>
    %c0_5 = arith.constant 0 : index
    %c0_6 = arith.constant 0 : index
    %4 = vector.load %arg2[%c0_5, %c0_6] : memref<1x96xbf16, #tpu.memory_space<vmem>>, vector<1x96xbf16>
    %5 = arith.extf %4 : vector<1x96xbf16> to vector<1x96xf32>
    %6 = vector.broadcast %5 : vector<1x96xf32> to vector<16x96xf32>
    %7 = arith.addf %3, %6 : vector<16x96xf32>
    %8 = arith.truncf %7 : vector<16x96xf32> to vector<16x96xbf16>
    %9 = tpu.iota {dimensions = array<i32: 0>} : vector<16x16xi32>
    %c-8_i32 = arith.constant -8 : i32
    %10 = vector.broadcast %c-8_i32 : i32 to vector<16x16xi32>
    %11 = arith.andi %9, %10 : vector<16x16xi32>
    %12 = tpu.iota {dimensions = array<i32: 1>} : vector<16x16xi32>
    %c-8_i32_7 = arith.constant -8 : i32
    %13 = vector.broadcast %c-8_i32_7 : i32 to vector<16x16xi32>
    %14 = arith.andi %12, %13 : vector<16x16xi32>
    %15 = arith.cmpi eq, %11, %14 : vector<16x16xi32>
    %cst_8 = arith.constant 0.000000e+00 : f32
    %cst_9 = arith.constant -1.000000e+30 : f32
    %16 = vector.broadcast %cst_8 : f32 to vector<16x16xf32>
    %17 = vector.broadcast %cst_9 : f32 to vector<16x16xf32>
    %18 = arith.select %15, %16, %17 : vector<16x16xi1>, vector<16x16xf32>
    %c0_10 = arith.constant 0 : index
    %c0_11 = arith.constant 0 : index
    %19 = vector.load %arg4[%c0_10, %c0_11] : memref<1x32xbf16, #tpu.memory_space<vmem>>, vector<1x32xbf16>
    %20 = arith.extf %19 : vector<1x32xbf16> to vector<1x32xf32>
    %21 = vector.extract_strided_slice %8 {offsets = [0, 0], sizes = [16, 16], strides = [1, 1]} : vector<16x96xbf16> to vector<16x16xbf16>
    %cst_12 = arith.constant 2.500000e-01 : bf16
    %22 = vector.broadcast %cst_12 : bf16 to vector<16x16xbf16>
    %23 = arith.mulf %21, %22 : vector<16x16xbf16>
    %24 = vector.extract_strided_slice %8 {offsets = [0, 32], sizes = [16, 16], strides = [1, 1]} : vector<16x96xbf16> to vector<16x16xbf16>
    %25 = vector.extract_strided_slice %8 {offsets = [0, 64], sizes = [16, 16], strides = [1, 1]} : vector<16x96xbf16> to vector<16x16xbf16>
    %cst_13 = arith.constant dense<0.000000e+00> : vector<16x16xf32>
    %26 = tpu.matmul %23, %24, %cst_13 {dimension_numbers = #tpu.dot_dimension_numbers<[1], [1], [0], [0], [0, 0, 1, 0], [], []>} : vector<16x16xbf16>, vector<16x16xbf16>, vector<16x16xf32> -> vector<16x16xf32>
    %27 = arith.addf %26, %18 : vector<16x16xf32>
    %cst_14 = arith.constant dense<0xFF800000> : vector<16xf32>
    %28 = vector.multi_reduction <maximumf>, %27, %cst_14 [1] : vector<16x16xf32> to vector<16xf32>
    %29 = vector.shape_cast %28 : vector<16xf32> to vector<16x1xf32>
    %30 = vector.broadcast %29 : vector<16x1xf32> to vector<16x16xf32>
    %31 = arith.subf %27, %30 : vector<16x16xf32>
    %32 = math.exp %31 : vector<16x16xf32>
    %cst_15 = arith.constant dense<0.000000e+00> : vector<16xf32>
    %33 = vector.multi_reduction <add>, %32, %cst_15 [1] : vector<16x16xf32> to vector<16xf32>
    %34 = vector.shape_cast %33 : vector<16xf32> to vector<16x1xf32>
    %35 = tpu.reciprocal %34 {approx = true} : vector<16x1xf32> -> vector<16x1xf32>
    %36 = vector.broadcast %35 : vector<16x1xf32> to vector<16x16xf32>
    %37 = arith.mulf %32, %36 : vector<16x16xf32>
    %38 = arith.truncf %37 : vector<16x16xf32> to vector<16x16xbf16>
    %cst_16 = arith.constant dense<0.000000e+00> : vector<16x16xf32>
    %39 = tpu.matmul %38, %25, %cst_16 {dimension_numbers = #tpu.dot_dimension_numbers<[1], [0], [0], [1], [0, 0, 1, 1], [], []>} : vector<16x16xbf16>, vector<16x16xbf16>, vector<16x16xf32> -> vector<16x16xf32>
    %40 = arith.truncf %39 : vector<16x16xf32> to vector<16x16xbf16>
    %41 = vector.extract_strided_slice %2 {offsets = [0, 0], sizes = [16, 32], strides = [1, 1]} : vector<32x32xbf16> to vector<16x32xbf16>
    %cst_17 = arith.constant dense<0.000000e+00> : vector<16x32xf32>
    %42 = tpu.matmul %40, %41, %cst_17 {dimension_numbers = #tpu.dot_dimension_numbers<[1], [0], [0], [1], [0, 0, 1, 1], [], []>} : vector<16x16xbf16>, vector<16x32xbf16>, vector<16x32xf32> -> vector<16x32xf32>
    %43 = vector.broadcast %20 : vector<1x32xf32> to vector<16x32xf32>
    %44 = arith.addf %43, %42 : vector<16x32xf32>
    %45 = vector.extract_strided_slice %8 {offsets = [0, 16], sizes = [16, 16], strides = [1, 1]} : vector<16x96xbf16> to vector<16x16xbf16>
    %cst_18 = arith.constant 2.500000e-01 : bf16
    %46 = vector.broadcast %cst_18 : bf16 to vector<16x16xbf16>
    %47 = arith.mulf %45, %46 : vector<16x16xbf16>
    %48 = vector.extract_strided_slice %8 {offsets = [0, 48], sizes = [16, 16], strides = [1, 1]} : vector<16x96xbf16> to vector<16x16xbf16>
    %49 = vector.extract_strided_slice %8 {offsets = [0, 80], sizes = [16, 16], strides = [1, 1]} : vector<16x96xbf16> to vector<16x16xbf16>
    %cst_19 = arith.constant dense<0.000000e+00> : vector<16x16xf32>
    %50 = tpu.matmul %47, %48, %cst_19 {dimension_numbers = #tpu.dot_dimension_numbers<[1], [1], [0], [0], [0, 0, 1, 0], [], []>} : vector<16x16xbf16>, vector<16x16xbf16>, vector<16x16xf32> -> vector<16x16xf32>
    %51 = arith.addf %50, %18 : vector<16x16xf32>
    %cst_20 = arith.constant dense<0xFF800000> : vector<16xf32>
    %52 = vector.multi_reduction <maximumf>, %51, %cst_20 [1] : vector<16x16xf32> to vector<16xf32>
    %53 = vector.shape_cast %52 : vector<16xf32> to vector<16x1xf32>
    %54 = vector.broadcast %53 : vector<16x1xf32> to vector<16x16xf32>
    %55 = arith.subf %51, %54 : vector<16x16xf32>
    %56 = math.exp %55 : vector<16x16xf32>
    %cst_21 = arith.constant dense<0.000000e+00> : vector<16xf32>
    %57 = vector.multi_reduction <add>, %56, %cst_21 [1] : vector<16x16xf32> to vector<16xf32>
    %58 = vector.shape_cast %57 : vector<16xf32> to vector<16x1xf32>
    %59 = tpu.reciprocal %58 {approx = true} : vector<16x1xf32> -> vector<16x1xf32>
    %60 = vector.broadcast %59 : vector<16x1xf32> to vector<16x16xf32>
    %61 = arith.mulf %56, %60 : vector<16x16xf32>
    %62 = arith.truncf %61 : vector<16x16xf32> to vector<16x16xbf16>
    %cst_22 = arith.constant dense<0.000000e+00> : vector<16x16xf32>
    %63 = tpu.matmul %62, %49, %cst_22 {dimension_numbers = #tpu.dot_dimension_numbers<[1], [0], [0], [1], [0, 0, 1, 1], [], []>} : vector<16x16xbf16>, vector<16x16xbf16>, vector<16x16xf32> -> vector<16x16xf32>
    %64 = arith.truncf %63 : vector<16x16xf32> to vector<16x16xbf16>
    %65 = vector.extract_strided_slice %2 {offsets = [16, 0], sizes = [16, 32], strides = [1, 1]} : vector<32x32xbf16> to vector<16x32xbf16>
    %cst_23 = arith.constant dense<0.000000e+00> : vector<16x32xf32>
    %66 = tpu.matmul %64, %65, %cst_23 {dimension_numbers = #tpu.dot_dimension_numbers<[1], [0], [0], [1], [0, 0, 1, 1], [], []>} : vector<16x16xbf16>, vector<16x32xbf16>, vector<16x32xf32> -> vector<16x32xf32>
    %67 = arith.addf %44, %66 : vector<16x32xf32>
    %68 = arith.truncf %67 : vector<16x32xf32> to vector<16x32xbf16>
    %c0_24 = arith.constant 0 : index
    %c0_25 = arith.constant 0 : index
    %69 = vector.load %arg5[%c0_24, %c0_25] : memref<16x32xbf16, #tpu.memory_space<vmem>>, vector<16x32xbf16>
    tpu.vector_store %arg5[%c0_24, %c0_25], %68 {strides = array<i32>} : memref<16x32xbf16, #tpu.memory_space<vmem>>, vector<16x32xbf16>,
    return
  }
}

</mosaic_0001>

<llo_original>
// kernel: _fused_attention.1
$region0: #{_fused_attention.1}
  #allocation0 [shape = 'u32[]', space=smem, size = 0x4, offset = 0x4, fixed_abs, tag = 'smem constant byte address 0x4 - core index']
  #allocation1 [shape = 'u32[144,128]{1,0:T(1,128)}', space=vmem, size = 0x12000, scoped, tag = 'internal scratch']
  %s0 = inlined_call_operand.hbm [shape: bf16[16,32], index: 0, kind: input, shape index: {}]
  %s1 = inlined_call_operand.hbm [shape: bf16[32,96], index: 1, kind: input, shape index: {}]
  %s2 = inlined_call_operand.vmem [shape: bf16[1,96], index: 2, kind: input, shape index: {}]
  %s3 = inlined_call_operand.hbm [shape: bf16[32,32], index: 3, kind: input, shape index: {}]
  %s4 = inlined_call_operand.vmem [shape: bf16[1,32], index: 4, kind: input, shape index: {}]
  %s5 = inlined_call_operand.hbm [shape: bf16[16,32], index: 5, kind: output, shape index: {}]
  %s6 = sld [smem:[#allocation0]]
  $region42: #{_fused_attention.1} parent=0
    _
  %s8 = ssub.s32 1, %s6
  %s9 = scalar_select 0, %s8, %s6
  $region1: #{_fused_attention.1} parent=0
    #allocation2 [shape = 'u8[4096]{0}', space=vmem, size = 0x1000, scoped, tag = 'input window, operand 0, single buffered']
    #allocation3 [shape = 's32[1]{0}', space=sflag, size = 0x4, scoped, tag = 'scoped memory for _fused_attention.1']
    #allocation4 [shape = 's32[1]{0}', space=sflag, size = 0x4, scoped, tag = 'scoped memory for _fused_attention.1']
    #allocation5 [shape = 'u8[8192]{0}', space=vmem, size = 0x2000, scoped, tag = 'input window, operand 1, single buffered']
    #allocation6 [shape = 's32[1]{0}', space=sflag, size = 0x4, scoped, tag = 'scoped memory for _fused_attention.1']
    #allocation7 [shape = 'u8[8192]{0}', space=vmem, size = 0x2000, scoped, tag = 'input window, operand 3, single buffered']
    #allocation8 [shape = 'u8[4096]{0}', space=vmem, size = 0x1000, scoped, tag = 'output window, operand 0, single buffered']
    %10 = vsyncpa [#allocation3], 0
    %11 = vsyncpa [#allocation6], 0
    %12 = vsyncpa [#allocation4], 0
    // Predicated region
    $region2: #{_fused_attention.1} parent=1 // pred_check
      _
    $region3: #{_fused_attention.1} parent=1 // pred_check_branch
      %14 = sbr.rel (0) target = $region5
    $region4: #{_fused_attention.1} parent=1 // pred_region
      %s16 = ssub.s32 128, 128
      %17 = vsyncadd [#allocation3], %s16
      %s18 = sshll.u32 [#allocation2], 4
      %s19 = int_to_ptr.vmem [resolvable:$true] %s18
      %24 = dma.hbm_to_vmem [thread:$0]  %s0, 128, %s19, [#allocation3], 64, 64, 4
    $region5: #{_fused_attention.1} parent=1 // pred_fallthru
      _
    // Predicated region
    $region6: #{_fused_attention.1} parent=1 // pred_check
      _
    $region7: #{_fused_attention.1} parent=1 // pred_check_branch
      %26 = sbr.rel (0) target = $region9
    $region8: #{_fused_attention.1} parent=1 // pred_region
      %s28 = ssub.s32 256, 256
      %29 = vsyncadd [#allocation6], %s28
      %s30 = sshll.u32 [#allocation5], 4
      %s31 = int_to_ptr.vmem [resolvable:$true] %s30
      %36 = dma.hbm_to_vmem [thread:$0]  %s1, 256, %s31, [#allocation6], 64, 64, 4
    $region9: #{_fused_attention.1} parent=1 // pred_fallthru
      _
    // Predicated region
    $region10: #{_fused_attention.1} parent=1 // pred_check
      _
    $region11: #{_fused_attention.1} parent=1 // pred_check_branch
      %38 = sbr.rel (0) target = $region13
    $region12: #{_fused_attention.1} parent=1 // pred_region
      _
    $region13: #{_fused_attention.1} parent=1 // pred_fallthru
      _
    // Predicated region
    $region14: #{_fused_attention.1} parent=1 // pred_check
      _
    $region15: #{_fused_attention.1} parent=1 // pred_check_branch
      %40 = sbr.rel (0) target = $region17
    $region16: #{_fused_attention.1} parent=1 // pred_region
      %s42 = ssub.s32 256, 256
      %43 = vsyncadd [#allocation6], %s42
      %s44 = sshll.u32 [#allocation7], 4
      %s45 = int_to_ptr.vmem [resolvable:$true] %s44
      %50 = dma.hbm_to_vmem [thread:$0]  %s3, 256, %s45, [#allocation6], 64, 64, 4
    $region17: #{_fused_attention.1} parent=1 // pred_fallthru
      _
    // Predicated region
    $region18: #{_fused_attention.1} parent=1 // pred_check
      _
    $region19: #{_fused_attention.1} parent=1 // pred_check_branch
      %52 = sbr.rel (0) target = $region21
    $region20: #{_fused_attention.1} parent=1 // pred_region
      _
    $region21: #{_fused_attention.1} parent=1 // pred_fallthru
      _
    // Predicated region
    $region22: #{_fused_attention.1} parent=1 // pred_check
      _
    $region23: #{_fused_attention.1} parent=1 // pred_check_branch
      %54 = sbr.rel (0) target = $region25
    $region24: #{_fused_attention.1} parent=1 // pred_region
      %55 = dma.done [#allocation3], 128
    $region25: #{_fused_attention.1} parent=1 // pred_fallthru
      _
    // Predicated region
    $region26: #{_fused_attention.1} parent=1 // pred_check
      _
    $region27: #{_fused_attention.1} parent=1 // pred_check_branch
      %57 = sbr.rel (0) target = $region29
    $region28: #{_fused_attention.1} parent=1 // pred_region
      %58 = dma.done [#allocation6], 256
    $region29: #{_fused_attention.1} parent=1 // pred_fallthru
      _
    // Predicated region
    $region30: #{_fused_attention.1} parent=1 // pred_check
      _
    $region31: #{_fused_attention.1} parent=1 // pred_check_branch
      %60 = sbr.rel (0) target = $region33
    $region32: #{_fused_attention.1} parent=1 // pred_region
      %61 = dma.done [#allocation6], 256
    $region33: #{_fused_attention.1} parent=1 // pred_fallthru
      _
    %v64 = vld [vmem:[#allocation2] sm:$0xf]
    %v65 = vld [vmem:[#allocation2 + $0x4] sm:$0xf]
    %v66 = vld [vmem:[#allocation5] sm:$0xf]
    %v67 = vld [vmem:[#allocation5 + $0x4] sm:$0xf]
    %v68 = vld [vmem:[#allocation5 + $0x8] sm:$0xf]
    %v69 = vld [vmem:[#allocation5 + $0xc] sm:$0xf]
    %v70 = vld [vmem:[#allocation7] sm:$0xf]
    %v71 = vld [vmem:[#allocation7 + $0x4] sm:$0xf]
    %v72 = vld [vmem:[#allocation7 + $0x8] sm:$0xf]
    %v73 = vld [vmem:[#allocation7 + $0xc] sm:$0xf]
    %v74 = vld [vmem:[%s2] sm:$0x1]
    %v75 = vunpack.c.l.bf16 %v74
    %v76 = vlaneseq
    %v77 = vshrl.u32 %v76, 7
    %v78 = vsub.s32 0, %v77
    %v79 = vrot.slane %v75, %v78
    %v82 = vunpack.c.l.b16 %v64
    %v83 = vunpack.c.l.b16 %v65
    %v84 = vpack.c.b16 %v83, %v82
    %v89 = vunpack.c.l.b16 %v66
    %v90 = vunpack.c.l.b16 %v67
    %v91 = vunpack.c.l.b16 %v68
    %v92 = vunpack.c.l.b16 %v69
    %v93 = vpack.c.b16 %v90, %v89
    %v94 = vpack.c.b16 %v92, %v91
    %vm97 = vcmask 261120
    %v99 = vsel %vm97, %v84, 0
    %101 = vmatprep.subr.bf16.mxu0 0
    %102 = vmatpush1.bf16.msra.mxu0 %v93
    %103 = vmatprep.subr.bf16.mxu0 0
    %104 = vmatpush1.bf16.msra.mxu0 %v94
    %105 = vmatprep.subr.bf16.mxu0 0
    %106 = vmatpush1.bf16.msra.mxu0 0
    %107 = vmatprep.subr.bf16.mxu0 0
    %108 = vmatpush1.bf16.msra.mxu0 0
    %109 = vmatprep.subr.bf16.mxu0 0
    %110 = vmatpush1.bf16.msra.mxu0 0
    %111 = vmatprep.subr.bf16.mxu0 0
    %112 = vmatpush1.bf16.msra.mxu0 0
    %113 = vmatprep.subr.bf16.mxu0 0
    %114 = vmatpush1.bf16.msra.mxu0 0
    %115 = vmatprep.subr.bf16.mxu0 0
    %116 = vmatpush1.bf16.msra.mxu0 0
    %117 = vmatprep.subr.bf16.mxu0 0
    %118 = vmatpush1.bf16.msra.mxu0 0
    %119 = vmatprep.subr.bf16.mxu0 0
    %120 = vmatpush1.bf16.msra.mxu0 0
    %121 = vmatprep.subr.bf16.mxu0 0
    %122 = vmatpush1.bf16.msra.mxu0 0
    %123 = vmatprep.subr.bf16.mxu0 0
    %124 = vmatpush1.bf16.msra.mxu0 0
    %125 = vmatprep.subr.bf16.mxu0 0
    %126 = vmatpush1.bf16.msra.mxu0 0
    %127 = vmatprep.subr.bf16.mxu0 0
    %128 = vmatpush1.bf16.msra.mxu0 0
    %129 = vmatprep.subr.bf16.mxu0 0
    %130 = vmatpush1.bf16.msra.mxu0 0
    %131 = vmatprep.subr.bf16.mxu0 0
    %132 = vmatpush1.bf16.msra.mxu0 0
    %133 = vmatprep.mubr.bf16.mxu0 0
    %134 = vmatmul.mubr.bf16.gmra.mrb[0].mxu0 %v99
    %v135 = vpop.f32.mrb[0].mxu0
    %v136 = vadd.f32 %v79, %v135
    %v137 = vpop.f32.mrb[0].mxu0
    %v138 = vpop.f32.mrb[0].mxu0
    %v139 = vadd.f32 %v79, %v138
    %v140 = vpop.f32.mrb[0].mxu0
    %141 = vdwg.mxu0
    %v142 = vpack.c.bf16 %v139, %v136
    %v143 = vlaneseq
    %v144 = vshrl.u32 %v143, 7
    %v145 = vadd.s32 %v144, 8
    %v146 = vand.u32 %v144, 4294967288
    %v147 = vand.u32 %v145, 4294967288
    %v148 = vlaneseq
    %v149 = vand.u32 %v148, 127
    %v150 = vand.u32 %v149, 4294967288
    %vm151 = vcmp.eq.s32.totalorder %v146, %v150
    %vm152 = vcmp.eq.s32.totalorder %v147, %v150
    %v153 = vsel %vm151, 0.0, -1e+30
    %v154 = vsel %vm152, 0.0, -1e+30
    %v155 = vld [vmem:[%s4] sm:$0x1]
    %v156 = vunpack.c.l.bf16 %v155
    %v157 = vmul.bf16 %v142, 1048592000
    %159 = vrot.lane.b32.xlu0 %v142, 96
    %v160 = vpop.permute.xlu0 %159
    %vm161 = vcmask 130048
    %v163 = vsel %vm161, %v157, 0
    %v166 = vsel %vm161, %v160, 0
    %168 = vmatprep.subr.bf16.mxu0 0
    %169 = vmatpush1.bf16.xpose.msra.mxu0 %v166
    %170 = vmatprep.subr.bf16.mxu0 0
    %171 = vmatpush1.bf16.xpose.msra.mxu0 0
    %172 = vmatprep.subr.bf16.mxu0 0
    %173 = vmatpush1.bf16.xpose.msra.mxu0 0
    %174 = vmatprep.subr.bf16.mxu0 0
    %175 = vmatpush1.bf16.xpose.msra.mxu0 0
    %176 = vmatprep.subr.bf16.mxu0 0
    %177 = vmatpush1.bf16.xpose.msra.mxu0 0
    %178 = vmatprep.subr.bf16.mxu0 0
    %179 = vmatpush1.bf16.xpose.msra.mxu0 0
    %180 = vmatprep.subr.bf16.mxu0 0
    %181 = vmatpush1.bf16.xpose.msra.mxu0 0
    %182 = vmatprep.subr.bf16.mxu0 0
    %183 = vmatpush1.bf16.xpose.msra.mxu0 0
    %184 = vmatprep.subr.bf16.mxu0 0
    %185 = vmatpush1.bf16.xpose.msra.mxu0 0
    %186 = vmatprep.subr.bf16.mxu0 0
    %187 = vmatpush1.bf16.xpose.msra.mxu0 0
    %188 = vmatprep.subr.bf16.mxu0 0
    %189 = vmatpush1.bf16.xpose.msra.mxu0 0
    %190 = vmatprep.subr.bf16.mxu0 0
    %191 = vmatpush1.bf16.xpose.msra.mxu0 0
    %192 = vmatprep.subr.bf16.mxu0 0
    %193 = vmatpush1.bf16.xpose.msra.mxu0 0
    %194 = vmatprep.subr.bf16.mxu0 0
    %195 = vmatpush1.bf16.xpose.msra.mxu0 0
    %196 = vmatprep.subr.bf16.mxu0 0
    %197 = vmatpush1.bf16.xpose.msra.mxu0 0
    %198 = vmatprep.subr.bf16.mxu0 0
    %199 = vmatpush1.bf16.xpose.msra.mxu0 0
    %200 = vmatprep.mubr.bf16.mxu0 0
    %201 = vmatmul.mubr.bf16.gmra.mrb[0].mxu0 %v163
    %v202 = vpop.f32.mrb[0].mxu0
    %v203 = vadd.f32 %v153, %v202
    %v204 = vpop.f32.mrb[0].mxu0
    %v205 = vpop.f32.mrb[0].mxu0
    %v206 = vadd.f32 %v154, %v205
    %v207 = vpop.f32.mrb[0].mxu0
    %208 = vdwg.mxu0
    %v209 = vsel %vm161, %v203, -inf
    %210 = vmax.xlane.f32.xlu0 %v209
    %v211 = vpop.xlane.xlu0 %210
    %v212 = vsel %vm161, %v206, -inf
    %213 = vmax.xlane.f32.xlu0 %v212
    %v214 = vpop.xlane.xlu0 %213
    %v215 = vsub.f32 %v203, %v211
    %v216 = vsub.f32 %v206, %v214
    %v217 = vmul.f32 %v215, 1.442695
    %v218 = vpow.pop %v217
    %v219 = vmul.f32 %v216, 1.442695
    %v220 = vpow.pop %v219
    %v221 = vsel %vm161, %v218, 0.0
    %222 = vadd.xlane.f32.xlu0 %v221
    %v223 = vpop.xlane.xlu0 %222
    %v224 = vsel %vm161, %v220, 0.0
    %225 = vadd.xlane.f32.xlu0 %v224
    %v226 = vpop.xlane.xlu0 %225
    %v227 = vrcp.pop %v223
    %v228 = vrcp.pop %v226
    %v229 = vmul.f32 %v218, %v227
    %v230 = vmul.f32 %v220, %v228
    %v231 = vpack.c.bf16 %v230, %v229
    %232 = vrot.lane.b32.xlu0 %v142, 64
    %v233 = vpop.permute.xlu0 %232
    %v236 = vsel %vm161, %v231, 0
    %238 = vmatprep.subr.bf16.mxu0 0
    %239 = vmatpush1.bf16.msra.mxu0 %v233
    %240 = vmatprep.subr.bf16.mxu0 0
    %241 = vmatpush1.bf16.msra.mxu0 0
    %242 = vmatprep.subr.bf16.mxu0 0
    %243 = vmatpush1.bf16.msra.mxu0 0
    %244 = vmatprep.subr.bf16.mxu0 0
    %245 = vmatpush1.bf16.msra.mxu0 0
    %246 = vmatprep.subr.bf16.mxu0 0
    %247 = vmatpush1.bf16.msra.mxu0 0
    %248 = vmatprep.subr.bf16.mxu0 0
    %249 = vmatpush1.bf16.msra.mxu0 0
    %250 = vmatprep.subr.bf16.mxu0 0
    %251 = vmatpush1.bf16.msra.mxu0 0
    %252 = vmatprep.subr.bf16.mxu0 0
    %253 = vmatpush1.bf16.msra.mxu0 0
    %254 = vmatprep.subr.bf16.mxu0 0
    %255 = vmatpush1.bf16.msra.mxu0 0
    %256 = vmatprep.subr.bf16.mxu0 0
    %257 = vmatpush1.bf16.msra.mxu0 0
    %258 = vmatprep.subr.bf16.mxu0 0
    %259 = vmatpush1.bf16.msra.mxu0 0
    %260 = vmatprep.subr.bf16.mxu0 0
    %261 = vmatpush1.bf16.msra.mxu0 0
    %262 = vmatprep.subr.bf16.mxu0 0
    %263 = vmatpush1.bf16.msra.mxu0 0
    %264 = vmatprep.subr.bf16.mxu0 0
    %265 = vmatpush1.bf16.msra.mxu0 0
    %266 = vmatprep.subr.bf16.mxu0 0
    %267 = vmatpush1.bf16.msra.mxu0 0
    %268 = vmatprep.subr.bf16.mxu0 0
    %269 = vmatpush1.bf16.msra.mxu0 0
    %270 = vmatprep.mubr.bf16.mxu0 0
    %271 = vmatmul.mubr.bf16.gmra.mrb[0].mxu0 %v236
    %v272 = vpop.f32.mrb[0].mxu0
    %v273 = vadd.f32 0.0, %v272
    %v274 = vpop.f32.mrb[0].mxu0
    %v275 = vpop.f32.mrb[0].mxu0
    %v276 = vadd.f32 0.0, %v275
    %v277 = vpop.f32.mrb[0].mxu0
    %278 = vdwg.mxu0
    %v279 = vpack.c.bf16 %v276, %v273
    %v282 = vunpack.c.l.b16 %v70
    %v283 = vunpack.c.l.b16 %v71
    %v284 = vpack.c.b16 %v283, %v282
    %v287 = vsel %vm161, %v279, 0
    %289 = vmatprep.subr.bf16.mxu0 0
    %290 = vmatpush1.bf16.msra.mxu0 %v284
    %291 = vmatprep.subr.bf16.mxu0 0
    %292 = vmatpush1.bf16.msra.mxu0 0
    %293 = vmatprep.subr.bf16.mxu0 0
    %294 = vmatpush1.bf16.msra.mxu0 0
    %295 = vmatprep.subr.bf16.mxu0 0
    %296 = vmatpush1.bf16.msra.mxu0 0
    %297 = vmatprep.subr.bf16.mxu0 0
    %298 = vmatpush1.bf16.msra.mxu0 0
    %299 = vmatprep.subr.bf16.mxu0 0
    %300 = vmatpush1.bf16.msra.mxu0 0
    %301 = vmatprep.subr.bf16.mxu0 0
    %302 = vmatpush1.bf16.msra.mxu0 0
    %303 = vmatprep.subr.bf16.mxu0 0
    %304 = vmatpush1.bf16.msra.mxu0 0
    %305 = vmatprep.subr.bf16.mxu0 0
    %306 = vmatpush1.bf16.msra.mxu0 0
    %307 = vmatprep.subr.bf16.mxu0 0
    %308 = vmatpush1.bf16.msra.mxu0 0
    %309 = vmatprep.subr.bf16.mxu0 0
    %310 = vmatpush1.bf16.msra.mxu0 0
    %311 = vmatprep.subr.bf16.mxu0 0
    %312 = vmatpush1.bf16.msra.mxu0 0
    %313 = vmatprep.subr.bf16.mxu0 0
    %314 = vmatpush1.bf16.msra.mxu0 0
    %315 = vmatprep.subr.bf16.mxu0 0
    %316 = vmatpush1.bf16.msra.mxu0 0
    %317 = vmatprep.subr.bf16.mxu0 0
    %318 = vmatpush1.bf16.msra.mxu0 0
    %319 = vmatprep.subr.bf16.mxu0 0
    %320 = vmatpush1.bf16.msra.mxu0 0
    %321 = vmatprep.mubr.bf16.mxu0 0
    %322 = vmatmul.mubr.bf16.gmra.mrb[0].mxu0 %v287
    %v323 = vpop.f32.mrb[0].mxu0
    %v324 = vadd.f32 0.0, %v323
    %v325 = vpop.f32.mrb[0].mxu0
    %v326 = vpop.f32.mrb[0].mxu0
    %v327 = vadd.f32 0.0, %v326
    %v328 = vpop.f32.mrb[0].mxu0
    %329 = vdwg.mxu0
    %v330 = vlaneseq
    %v331 = vshrl.u32 %v330, 7
    %v332 = vsub.s32 0, %v331
    %v333 = vrot.slane %v156, %v332
    %v334 = vadd.f32 %v333, %v324
    %v335 = vadd.f32 %v333, %v327
    %337 = vrot.lane.b32.xlu0 %v157, 112
    %v338 = vpop.permute.xlu0 %337
    %339 = vrot.lane.b32.xlu0 %v142, 80
    %v340 = vpop.permute.xlu0 %339
    %v342 = vsel %vm161, %v338, 0
    %v345 = vsel %vm161, %v340, 0
    %347 = vmatprep.subr.bf16.mxu0 0
    %348 = vmatpush1.bf16.xpose.msra.mxu0 %v345
    %349 = vmatprep.subr.bf16.mxu0 0
    %350 = vmatpush1.bf16.xpose.msra.mxu0 0
    %351 = vmatprep.subr.bf16.mxu0 0
    %352 = vmatpush1.bf16.xpose.msra.mxu0 0
    %353 = vmatprep.subr.bf16.mxu0 0
    %354 = vmatpush1.bf16.xpose.msra.mxu0 0
    %355 = vmatprep.subr.bf16.mxu0 0
    %356 = vmatpush1.bf16.xpose.msra.mxu0 0
    %357 = vmatprep.subr.bf16.mxu0 0
    %358 = vmatpush1.bf16.xpose.msra.mxu0 0
    %359 = vmatprep.subr.bf16.mxu0 0
    %360 = vmatpush1.bf16.xpose.msra.mxu0 0
    %361 = vmatprep.subr.bf16.mxu0 0
    %362 = vmatpush1.bf16.xpose.msra.mxu0 0
    %363 = vmatprep.subr.bf16.mxu0 0
    %364 = vmatpush1.bf16.xpose.msra.mxu0 0
    %365 = vmatprep.subr.bf16.mxu0 0
    %366 = vmatpush1.bf16.xpose.msra.mxu0 0
    %367 = vmatprep.subr.bf16.mxu0 0
    %368 = vmatpush1.bf16.xpose.msra.mxu0 0
    %369 = vmatprep.subr.bf16.mxu0 0
    %370 = vmatpush1.bf16.xpose.msra.mxu0 0
    %371 = vmatprep.subr.bf16.mxu0 0
    %372 = vmatpush1.bf16.xpose.msra.mxu0 0
    %373 = vmatprep.subr.bf16.mxu0 0
    %374 = vmatpush1.bf16.xpose.msra.mxu0 0
    %375 = vmatprep.subr.bf16.mxu0 0
    %376 = vmatpush1.bf16.xpose.msra.mxu0 0
    %377 = vmatprep.subr.bf16.mxu0 0
    %378 = vmatpush1.bf16.xpose.msra.mxu0 0
    %379 = vmatprep.mubr.bf16.mxu0 0
    %380 = vmatmul.mubr.bf16.gmra.mrb[0].mxu0 %v342
    %v381 = vpop.f32.mrb[0].mxu0
    %v382 = vadd.f32 %v153, %v381
    %v383 = vpop.f32.mrb[0].mxu0
    %v384 = vpop.f32.mrb[0].mxu0
    %v385 = vadd.f32 %v154, %v384
    %v386 = vpop.f32.mrb[0].mxu0
    %387 = vdwg.mxu0
    %v388 = vsel %vm161, %v382, -inf
    %389 = vmax.xlane.f32.xlu0 %v388
    %v390 = vpop.xlane.xlu0 %389
    %v391 = vsel %vm161, %v385, -inf
    %392 = vmax.xlane.f32.xlu0 %v391
    %v393 = vpop.xlane.xlu0 %392
    %v394 = vsub.f32 %v382, %v390
    %v395 = vsub.f32 %v385, %v393
    %v396 = vmul.f32 %v394, 1.442695
    %v397 = vpow.pop %v396
    %v398 = vmul.f32 %v395, 1.442695
    %v399 = vpow.pop %v398
    %v400 = vsel %vm161, %v397, 0.0
    %401 = vadd.xlane.f32.xlu0 %v400
    %v402 = vpop.xlane.xlu0 %401
    %v403 = vsel %vm161, %v399, 0.0
    %404 = vadd.xlane.f32.xlu0 %v403
    %v405 = vpop.xlane.xlu0 %404
    %v406 = vrcp.pop %v402
    %v407 = vrcp.pop %v405
    %v408 = vmul.f32 %v397, %v406
    %v409 = vmul.f32 %v399, %v407
    %v410 = vpack.c.bf16 %v409, %v408
    %411 = vrot.lane.b32.xlu0 %v142, 48
    %v412 = vpop.permute.xlu0 %411
    %v415 = vsel %vm161, %v410, 0
    %417 = vmatprep.subr.bf16.mxu0 0
    %418 = vmatpush1.bf16.msra.mxu0 %v412
    %419 = vmatprep.subr.bf16.mxu0 0
    %420 = vmatpush1.bf16.msra.mxu0 0
    %421 = vmatprep.subr.bf16.mxu0 0
    %422 = vmatpush1.bf16.msra.mxu0 0
    %423 = vmatprep.subr.bf16.mxu0 0
    %424 = vmatpush1.bf16.msra.mxu0 0
    %425 = vmatprep.subr.bf16.mxu0 0
    %426 = vmatpush1.bf16.msra.mxu0 0
    %427 = vmatprep.subr.bf16.mxu0 0
    %428 = vmatpush1.bf16.msra.mxu0 0
    %429 = vmatprep.subr.bf16.mxu0 0
    %430 = vmatpush1.bf16.msra.mxu0 0
    %431 = vmatprep.subr.bf16.mxu0 0
    %432 = vmatpush1.bf16.msra.mxu0 0
    %433 = vmatprep.subr.bf16.mxu0 0
    %434 = vmatpush1.bf16.msra.mxu0 0
    %435 = vmatprep.subr.bf16.mxu0 0
    %436 = vmatpush1.bf16.msra.mxu0 0
    %437 = vmatprep.subr.bf16.mxu0 0
    %438 = vmatpush1.bf16.msra.mxu0 0
    %439 = vmatprep.subr.bf16.mxu0 0
    %440 = vmatpush1.bf16.msra.mxu0 0
    %441 = vmatprep.subr.bf16.mxu0 0
    %442 = vmatpush1.bf16.msra.mxu0 0
    %443 = vmatprep.subr.bf16.mxu0 0
    %444 = vmatpush1.bf16.msra.mxu0 0
    %445 = vmatprep.subr.bf16.mxu0 0
    %446 = vmatpush1.bf16.msra.mxu0 0
    %447 = vmatprep.subr.bf16.mxu0 0
    %448 = vmatpush1.bf16.msra.mxu0 0
    %449 = vmatprep.mubr.bf16.mxu0 0
    %450 = vmatmul.mubr.bf16.gmra.mrb[0].mxu0 %v415
    %v451 = vpop.f32.mrb[0].mxu0
    %v452 = vadd.f32 0.0, %v451
    %v453 = vpop.f32.mrb[0].mxu0
    %v454 = vpop.f32.mrb[0].mxu0
    %v455 = vadd.f32 0.0, %v454
    %v456 = vpop.f32.mrb[0].mxu0
    %457 = vdwg.mxu0
    %v458 = vpack.c.bf16 %v455, %v452
    %v461 = vunpack.c.l.b16 %v72
    %v462 = vunpack.c.l.b16 %v73
    %v463 = vpack.c.b16 %v462, %v461
    %v466 = vsel %vm161, %v458, 0
    %468 = vmatprep.subr.bf16.mxu0 0
    %469 = vmatpush1.bf16.msra.mxu0 %v463
    %470 = vmatprep.subr.bf16.mxu0 0
    %471 = vmatpush1.bf16.msra.mxu0 0
    %472 = vmatprep.subr.bf16.mxu0 0
    %473 = vmatpush1.bf16.msra.mxu0 0
    %474 = vmatprep.subr.bf16.mxu0 0
    %475 = vmatpush1.bf16.msra.mxu0 0
    %476 = vmatprep.subr.bf16.mxu0 0
    %477 = vmatpush1.bf16.msra.mxu0 0
    %478 = vmatprep.subr.bf16.mxu0 0
    %479 = vmatpush1.bf16.msra.mxu0 0
    %480 = vmatprep.subr.bf16.mxu0 0
    %481 = vmatpush1.bf16.msra.mxu0 0
    %482 = vmatprep.subr.bf16.mxu0 0
    %483 = vmatpush1.bf16.msra.mxu0 0
    %484 = vmatprep.subr.bf16.mxu0 0
    %485 = vmatpush1.bf16.msra.mxu0 0
    %486 = vmatprep.subr.bf16.mxu0 0
    %487 = vmatpush1.bf16.msra.mxu0 0
    %488 = vmatprep.subr.bf16.mxu0 0
    %489 = vmatpush1.bf16.msra.mxu0 0
    %490 = vmatprep.subr.bf16.mxu0 0
    %491 = vmatpush1.bf16.msra.mxu0 0
    %492 = vmatprep.subr.bf16.mxu0 0
    %493 = vmatpush1.bf16.msra.mxu0 0
    %494 = vmatprep.subr.bf16.mxu0 0
    %495 = vmatpush1.bf16.msra.mxu0 0
    %496 = vmatprep.subr.bf16.mxu0 0
    %497 = vmatpush1.bf16.msra.mxu0 0
    %498 = vmatprep.subr.bf16.mxu0 0
    %499 = vmatpush1.bf16.msra.mxu0 0
    %500 = vmatprep.mubr.bf16.mxu0 0
    %501 = vmatmul.mubr.bf16.gmra.mrb[0].mxu0 %v466
    %v502 = vpop.f32.mrb[0].mxu0
    %v503 = vadd.f32 0.0, %v502
    %v504 = vpop.f32.mrb[0].mxu0
    %v505 = vpop.f32.mrb[0].mxu0
    %v506 = vadd.f32 0.0, %v505
    %v507 = vpop.f32.mrb[0].mxu0
    %508 = vdwg.mxu0
    %v509 = vadd.f32 %v334, %v503
    %v510 = vadd.f32 %v335, %v506
    %v511 = vpack.c.bf16 %v510, %v509
    %v513 = vunpack.c.l.b16 %v511
    %v514 = vunpack.c.h.b16 %v511
    %v515 = vpack.c.b16 %v513, %v513
    %v516 = vpack.c.b16 %v514, %v514
    %vm519 = vcmask 257024
    %520 = vst.msk [vmem:[#allocation8] sm:$0xf] %vm519, %v515
    %521 = vst.msk [vmem:[#allocation8 + $0x4] sm:$0xf] %vm519, %v516
    // Predicated region
    $region34: #{_fused_attention.1} parent=1 // pred_check
      _
    $region35: #{_fused_attention.1} parent=1 // pred_check_branch
      %523 = sbr.rel (0) target = $region37
    $region36: #{_fused_attention.1} parent=1 // pred_region
      %s525 = ssub.s32 128, 128
      %526 = vsyncadd [#allocation4], %s525
      %s527 = sshll.u32 [#allocation8], 4
      %s528 = int_to_ptr.vmem [resolvable:$true] %s527
      %533 = dma.vmem_to_hbm [thread:$0]  %s528, 128, %s5, [#allocation4], 64, 64, 4
    $region37: #{_fused_attention.1} parent=1 // pred_fallthru
      _
    // Predicated region
    $region38: #{_fused_attention.1} parent=1 // pred_check
      _
    $region39: #{_fused_attention.1} parent=1 // pred_check_branch
      %535 = sbr.rel (0) target = $region41
    $region40: #{_fused_attention.1} parent=1 // pred_region
      %536 = dma.done [#allocation4], 128
    $region41: #{_fused_attention.1} parent=1 // pred_fallthru
      _
    %537 = vsyncpa [#allocation3], 1
    %538 = vsyncpa [#allocation6], 1
    %539 = vsyncpa [#allocation4], 1

</llo_original>
